<compile_context>
chip_gen: v6e
topology: v6e:2x2x1
jax: 0.10.0
libtpu: 0.0.40
codegen_flags: <defaults>
</compile_context>

<pallas_src>
import jax
import jax.numpy as jnp
from jax.experimental import pallas as pl
from jax.experimental.pallas import tpu as pltpu


def _cdiv(a: int, b: int) -> int:
    return -(-a // b)


def _round_up(x: int, m: int) -> int:
    return ((x + m - 1) // m) * m


def _sublane_multiple(*dtypes) -> int:
    """Minimum second-to-last block dim: 8 (f32), 16 (bf16), 32 (int8/fp8)."""
    m = 8
    for dt in dtypes:
        item = jnp.dtype(dt).itemsize
        m = max(m, 32 // max(item, 1))
    return m


def _vmem_capacity_bytes() -> int:
    try:
        return int(pltpu.get_tpu_info().vmem_capacity_bytes)
    except Exception:
        return 64 << 20  # conservative (v7x per-TC size)


def _norm_matmul_kernel_f32(x_ref, w_ref, o_ref, sq_ref):
    # x_ref: (tm, tk)  w_ref: (tk, tn)  o_ref: (tm, tn) f32  sq_ref: (1, tn) f32
    k = pl.program_id(2)

    @pl.when(k == 0)
    def _init():
        o_ref[...] = jnp.zeros_like(o_ref)
        sq_ref[...] = jnp.zeros_like(sq_ref)

    w = w_ref[...]
    # MXU: native-dtype operands, f32 accumulation directly into the resident
    # output block (its index map ignores k).
    o_ref[...] += jnp.dot(x_ref[...], w, preferred_element_type=jnp.float32)
    # XLU: per-column sum of squares of this K slab (hidden under the MXU).
    wf = w.astype(jnp.float32)
    sq_ref[...] += jnp.sum(wf * wf, axis=0, keepdims=True)

    @pl.when(k == pl.num_programs(2) - 1)
    def _finalize():
        # Matches F.normalize(dim=0): denominator = max(||col||_2, 1e-12).
        inv = 1.0 / jnp.maximum(jnp.sqrt(sq_ref[...]), 1e-12)
        o_ref[...] = o_ref[...] * inv


def _norm_matmul_kernel_acc(x_ref, w_ref, o_ref, acc_ref, sq_ref):
    # Variant for non-f32 outputs: f32 accumulator scratch, cast at the end.
    k = pl.program_id(2)

    @pl.when(k == 0)
    def _init():
        acc_ref[...] = jnp.zeros_like(acc_ref)
        sq_ref[...] = jnp.zeros_like(sq_ref)

    w = w_ref[...]
    acc_ref[...] += jnp.dot(x_ref[...], w, preferred_element_type=jnp.float32)
    wf = w.astype(jnp.float32)
    sq_ref[...] += jnp.sum(wf * wf, axis=0, keepdims=True)

    @pl.when(k == pl.num_programs(2) - 1)
    def _finalize():
        inv = 1.0 / jnp.maximum(jnp.sqrt(sq_ref[...]), 1e-12)
        o_ref[...] = (acc_ref[...] * inv).astype(o_ref.dtype)


def norm_linear(x, weight, *, tm=512, tn=512, tk=1024):
    """x: (..., in_dim), weight: (in_dim, out_dim) -> (..., out_dim).

    Equivalent to torch.matmul(x, F.normalize(weight, dim=0)).
    """
    orig_shape = x.shape
    in_dim = orig_shape[-1]
    k_w, out_dim = weight.shape
    assert k_w == in_dim, "weight must be (in_dim, out_dim)"

    x2d = x.reshape(-1, in_dim)
    M = x2d.shape[0]
    out_dtype = jnp.result_type(x2d.dtype, weight.dtype)
    out_is_f32 = out_dtype == jnp.float32

    sub = _sublane_multiple(x2d.dtype, out_dtype)

    # --- Tile selection (no M/N padding: full-dim blocks or partial tails) ---
    if M <= tm:
        tm_eff = M                      # "equals full dim" is always legal
    else:
        tm_eff = _round_up(tm, sub)

    if out_dim <= tn:
        tn_eff = out_dim
    else:
        tn_eff = _round_up(tn, 128)

    gm = _cdiv(M, tm_eff)
    # Keep at least one parallel axis >= 2 so the second TC (v7x) isn't idle.
    if gm == 1 and _cdiv(out_dim, tn_eff) == 1 and out_dim >= 256:
        tn_eff = _round_up(_cdiv(out_dim, 2), 128)
    gn = _cdiv(out_dim, tn_eff)

    # K must be a whole number of tk blocks (garbage in a partial K block would
    # corrupt every real output).  Pick tk to minimize the zero-pad.
    if in_dim <= tk:
        tk_eff = in_dim
        K_pad = in_dim
    else:
        n_k = _cdiv(in_dim, _round_up(tk, 128))
        tk_eff = _round_up(_cdiv(in_dim, n_k), 128)
        K_pad = _round_up(in_dim, tk_eff)
    gk = K_pad // tk_eff

    if K_pad != in_dim:
        x_in = jnp.pad(x2d, ((0, 0), (0, K_pad - in_dim)))
        w_in = jnp.pad(weight, ((0, K_pad - in_dim), (0, 0)))
    else:
        x_in = x2d
        w_in = weight

    # --- VMEM budget (generation-aware cap, headroom for Mosaic scratch) -----
    xb = x_in.dtype.itemsize
    wb = w_in.dtype.itemsize
    ob = jnp.dtype(out_dtype).itemsize
    acc_bytes = 0 if out_is_f32 else tm_eff * tn_eff * 4
    vmem_est = (
        2 * tm_eff * tk_eff * xb          # x tiles (double-buffered)
        + 2 * tk_eff * tn_eff * wb        # w tiles (double-buffered)
        + 2 * tm_eff * tn_eff * ob        # out tiles (double-buffered)
        + acc_bytes                       # f32 accumulator (non-f32 out only)
        + 8 * _round_up(tn_eff, 128) * 4  # sq scratch (padded)
    )
    vmem_cap = max(16 << 20, int(0.75 * _vmem_capacity_bytes()))
    vmem_limit = int(min(max(2 * vmem_est, 16 << 20), vmem_cap))

    # --- Cost estimate with actual re-read factors ---------------------------
    cost = pl.CostEstimate(
        flops=2 * M * out_dim * K_pad,
        transcendentals=gm * out_dim,     # sqrt + reciprocal per col per m-tile
        bytes_accessed=(
            gn * M * K_pad * xb           # x re-read once per N tile
            + gm * K_pad * out_dim * wb   # w re-read once per M tile
            + M * out_dim * ob
        ),
    )

    in_specs = [
        pl.BlockSpec((tm_eff, tk_eff), lambda i, j, k: (i, k)),
        pl.BlockSpec((tk_eff, tn_eff), lambda i, j, k: (k, j)),
    ]
    out_spec = pl.BlockSpec((tm_eff, tn_eff), lambda i, j, k: (i, j))

    if out_is_f32:
        kernel = _norm_matmul_kernel_f32
        scratch = [pltpu.VMEM((1, tn_eff), jnp.float32)]
    else:
        kernel = _norm_matmul_kernel_acc
        scratch = [
            pltpu.VMEM((tm_eff, tn_eff), jnp.float32),
            pltpu.VMEM((1, tn_eff), jnp.float32),
        ]

    out = pl.pallas_call(
        kernel,
        out_shape=jax.ShapeDtypeStruct((M, out_dim), out_dtype),
        grid=(gm, gn, gk),
        in_specs=in_specs,
        out_specs=out_spec,
        scratch_shapes=scratch,
        compiler_params=pltpu.CompilerParams(
            dimension_semantics=("parallel", "parallel", "arbitrary"),
            vmem_limit_bytes=vmem_limit,
        ),
        cost_estimate=cost,
    )(x_in, w_in)

    return out.reshape(*orig_shape[:-1], out_dim)


def xavier_uniform_relu(key, in_dim, out_dim, dtype=jnp.float32):
    # nn.init.xavier_uniform_ with gain = calculate_gain('relu') = sqrt(2)
    gain = jnp.sqrt(2.0)
    bound = gain * jnp.sqrt(6.0 / (in_dim + out_dim))
    return jax.random.uniform(
        key, (in_dim, out_dim), dtype=dtype, minval=-bound, maxval=bound
    )


def _reference(x, weight):
    w = weight.astype(jnp.float32)
    w_n = w / jnp.maximum(jnp.linalg.norm(w, axis=0, keepdims=True), 1e-12)
    return x.astype(jnp.float32) @ w_n


if __name__ == "__main__":
    key = jax.random.PRNGKey(0)
    k_x, k_w, k_x2, k_w2 = jax.random.split(key, 4)

    # Test 1: the module's natural small shape.
    batch, seq, in_dim, out_dim = 2, 8, 32, 128
    x = jax.random.normal(k_x, (batch, seq, in_dim), dtype=jnp.float32)
    weight = xavier_uniform_relu(k_w, in_dim, out_dim)

    out = norm_linear(x, weight)
    out = jax.block_until_ready(out)
    ref = _reference(x, weight)
    assert out.shape == (batch, seq, out_dim)
    assert jnp.allclose(out, ref, atol=1e-5, rtol=1e-5)

    # Test 2: ragged dims (exercise the partial-block / K-pad path).
    b2, s2, in2, out2 = 3, 5, 48, 100
    x2 = jax.random.normal(k_x2, (b2, s2, in2), dtype=jnp.float32)
    w2 = xavier_uniform_relu(k_w2, in2, out2)

    out_2 = norm_linear(x2, w2)
    out_2 = jax.block_until_ready(out_2)
    ref_2 = _reference(x2, w2)
    assert out_2.shape == (b2, s2, out2)
    assert jnp.allclose(out_2, ref_2, atol=1e-5, rtol=1e-5)

    print("KERNEL_OK")
</pallas_src>

<mosaic_0001>
module attributes {stable_mosaic.version = 11 : i64} {
  func.func @_norm_matmul_kernel_f32(%arg0: i32, %arg1: i32, %arg2: i32, %arg3: memref<16x32xf32, #tpu.memory_space<vmem>>, %arg4: memref<32x128xf32, #tpu.memory_space<vmem>>, %arg5: memref<16x128xf32, #tpu.memory_space<vmem>>, %arg6: memref<1x128xf32, #tpu.memory_space<vmem>>) attributes {dimension_semantics = [#tpu.dimension_semantics<parallel>, #tpu.dimension_semantics<parallel>, #tpu.dimension_semantics<arbitrary>], iteration_bounds = array<i64: 1, 1, 1>, scalar_prefetch = 0 : i64, scratch_operands = 1 : i64, tpu.core_type = #tpu.core_type<tc>, window_params = [{transform_indices = @transform_0, window_bounds = array<i64: 16, 32>}, {transform_indices = @transform_1, window_bounds = array<i64: 32, 128>}, {transform_indices = @transform_2, window_bounds = array<i64: 16, 128>}]} {
    %c0_i32 = arith.constant 0 : i32
    %0 = arith.cmpi eq, %arg2, %c0_i32 : i32
    %1 = arith.extui %0 : i1 to i32
    %c0_i32_0 = arith.constant 0 : i32
    %2 = arith.cmpi ne, %1, %c0_i32_0 : i32
    scf.if %2 {
      %cst_15 = arith.constant 0.000000e+00 : f32
      %18 = vector.broadcast %cst_15 : f32 to vector<16x128xf32>
      %c0_16 = arith.constant 0 : index
      %c0_17 = arith.constant 0 : index
      %19 = vector.load %arg5[%c0_16, %c0_17] : memref<16x128xf32, #tpu.memory_space<vmem>>, vector<16x128xf32>
      tpu.vector_store %arg5[%c0_16, %c0_17], %18 {strides = array<i32>} : memref<16x128xf32, #tpu.memory_space<vmem>>, vector<16x128xf32>,
      %cst_18 = arith.constant 0.000000e+00 : f32
      %20 = vector.broadcast %cst_18 : f32 to vector<1x128xf32>
      %c0_19 = arith.constant 0 : index
      %c0_20 = arith.constant 0 : index
      %21 = vector.load %arg6[%c0_19, %c0_20] : memref<1x128xf32, #tpu.memory_space<vmem>>, vector<1x128xf32>
      tpu.vector_store %arg6[%c0_19, %c0_20], %20 {strides = array<i32>} : memref<1x128xf32, #tpu.memory_space<vmem>>, vector<1x128xf32>,
    } else {
    }
    %c0 = arith.constant 0 : index
    %c0_1 = arith.constant 0 : index
    %3 = vector.load %arg4[%c0, %c0_1] : memref<32x128xf32, #tpu.memory_space<vmem>>, vector<32x128xf32>
    %c0_2 = arith.constant 0 : index
    %c0_3 = arith.constant 0 : index
    %4 = vector.load %arg5[%c0_2, %c0_3] : memref<16x128xf32, #tpu.memory_space<vmem>>, vector<16x128xf32>
    %c0_4 = arith.constant 0 : index
    %c0_5 = arith.constant 0 : index
    %5 = vector.load %arg3[%c0_4, %c0_5] : memref<16x32xf32, #tpu.memory_space<vmem>>, vector<16x32xf32>
    %cst = arith.constant dense<0.000000e+00> : vector<16x128xf32>
    %6 = tpu.matmul %5, %3, %cst {dimension_numbers = #tpu.dot_dimension_numbers<[1], [0], [0], [1], [0, 0, 1, 1], [], []>} : vector<16x32xf32>, vector<32x128xf32>, vector<16x128xf32> -> vector<16x128xf32>
    %7 = arith.addf %4, %6 : vector<16x128xf32>
    %c0_6 = arith.constant 0 : index
    %c0_7 = arith.constant 0 : index
    %8 = vector.load %arg5[%c0_6, %c0_7] : memref<16x128xf32, #tpu.memory_space<vmem>>, vector<16x128xf32>
    tpu.vector_store %arg5[%c0_6, %c0_7], %7 {strides = array<i32>} : memref<16x128xf32, #tpu.memory_space<vmem>>, vector<16x128xf32>,
    %c0_8 = arith.constant 0 : index
    %c0_9 = arith.constant 0 : index
    %9 = vector.load %arg6[%c0_8, %c0_9] : memref<1x128xf32, #tpu.memory_space<vmem>>, vector<1x128xf32>
    %10 = arith.mulf %3, %3 : vector<32x128xf32>
    %cst_10 = arith.constant dense<0.000000e+00> : vector<128xf32>
    %11 = vector.multi_reduction <add>, %10, %cst_10 [0] : vector<32x128xf32> to vector<128xf32>
    %12 = vector.shape_cast %11 : vector<128xf32> to vector<1x128xf32>
    %13 = arith.addf %9, %12 : vector<1x128xf32>
    %c0_11 = arith.constant 0 : index
    %c0_12 = arith.constant 0 : index
    %14 = vector.load %arg6[%c0_11, %c0_12] : memref<1x128xf32, #tpu.memory_space<vmem>>, vector<1x128xf32>
    tpu.vector_store %arg6[%c0_11, %c0_12], %13 {strides = array<i32>} : memref<1x128xf32, #tpu.memory_space<vmem>>, vector<1x128xf32>,
    %c0_i32_13 = arith.constant 0 : i32
    %15 = arith.cmpi eq, %arg2, %c0_i32_13 : i32
    %16 = arith.extui %15 : i1 to i32
    %c0_i32_14 = arith.constant 0 : i32
    %17 = arith.cmpi ne, %16, %c0_i32_14 : i32
    scf.if %17 {
      %c0_15 = arith.constant 0 : index
      %c0_16 = arith.constant 0 : index
      %18 = vector.load %arg6[%c0_15, %c0_16] : memref<1x128xf32, #tpu.memory_space<vmem>>, vector<1x128xf32>
      %19 = math.sqrt %18 : vector<1x128xf32>
      %cst_17 = arith.constant 9.99999996E-13 : f32
      %20 = vector.broadcast %cst_17 : f32 to vector<1x128xf32>
      %21 = arith.maximumf %19, %20 : vector<1x128xf32>
      %cst_18 = arith.constant 1.000000e+00 : f32
      %22 = vector.broadcast %cst_18 : f32 to vector<1x128xf32>
      %23 = arith.divf %22, %21 : vector<1x128xf32>
      %c0_19 = arith.constant 0 : index
      %c0_20 = arith.constant 0 : index
      %24 = vector.load %arg5[%c0_19, %c0_20] : memref<16x128xf32, #tpu.memory_space<vmem>>, vector<16x128xf32>
      %25 = vector.broadcast %23 : vector<1x128xf32> to vector<16x128xf32>
      %26 = arith.mulf %24, %25 : vector<16x128xf32>
      %c0_21 = arith.constant 0 : index
      %c0_22 = arith.constant 0 : index
      %27 = vector.load %arg5[%c0_21, %c0_22] : memref<16x128xf32, #tpu.memory_space<vmem>>, vector<16x128xf32>
      tpu.vector_store %arg5[%c0_21, %c0_22], %26 {strides = array<i32>} : memref<16x128xf32, #tpu.memory_space<vmem>>, vector<16x128xf32>,
    } else {
    }
    return
  }
  func.func @transform_0(%arg0: i32, %arg1: i32, %arg2: i32) -> (i32, i32) {
    %c0_i32 = arith.constant 0 : i32
    return %arg0, %arg2 : i32, i32
  }
  func.func @transform_1(%arg0: i32, %arg1: i32, %arg2: i32) -> (i32, i32) {
    %c0_i32 = arith.constant 0 : i32
    return %arg2, %arg1 : i32, i32
  }
  func.func @transform_2(%arg0: i32, %arg1: i32, %arg2: i32) -> (i32, i32) {
    %c0_i32 = arith.constant 0 : i32
    return %arg0, %arg1 : i32, i32
  }
}

</mosaic_0001>

<llo_original>
// kernel: tpu_custom_call.1
$region0: #{tpu_custom_call.1}
  #allocation0 [shape = 'u32[]', space=smem, size = 0x4, offset = 0x4, fixed_abs, tag = 'smem constant byte address 0x4 - core index']
  #allocation1 [shape = 'u32[144,128]{1,0:T(1,128)}', space=vmem, size = 0x12000, scoped, tag = 'internal scratch']
  #allocation2 [shape = 'f32[1,128]{1,0:T(1,128)}', space=vmem, size = 0x200, scoped, tag = 'scratch operand']
  %s0 = inlined_call_operand.hbm [shape: f32[16,32], index: 0, kind: input, shape index: {}]
  %s1 = inlined_call_operand.hbm [shape: f32[32,128], index: 1, kind: input, shape index: {}]
  %s2 = inlined_call_operand.hbm [shape: f32[16,128], index: 2, kind: output, shape index: {}]
  %s3 = sld [smem:[#allocation0]]
  $region34: #{tpu_custom_call.1} parent=0
    _
  %s5 = ssub.s32 1, %s3
  %s6 = scalar_select 0, %s5, %s3
  $region1: #{tpu_custom_call.1} parent=0
    #allocation3 [shape = 'u8[8192]{0}', space=vmem, size = 0x2000, scoped, tag = 'input window, operand 0, single buffered']
    #allocation4 [shape = 's32[1]{0}', space=sflag, size = 0x4, scoped, tag = 'scoped memory for tpu_custom_call.1']
    #allocation5 [shape = 's32[1]{0}', space=sflag, size = 0x4, scoped, tag = 'scoped memory for tpu_custom_call.1']
    #allocation6 [shape = 'u8[16384]{0}', space=vmem, size = 0x4000, scoped, tag = 'input window, operand 1, single buffered']
    #allocation7 [shape = 's32[1]{0}', space=sflag, size = 0x4, scoped, tag = 'scoped memory for tpu_custom_call.1']
    #allocation8 [shape = 'u8[8192]{0}', space=vmem, size = 0x2000, scoped, tag = 'output window, operand 0, single buffered']
    %7 = vsyncpa [#allocation4], 0
    %8 = vsyncpa [#allocation7], 0
    %9 = vsyncpa [#allocation5], 0
    // Predicated region
    $region2: #{tpu_custom_call.1} parent=1 // pred_check
      _
    $region3: #{tpu_custom_call.1} parent=1 // pred_check_branch
      %11 = sbr.rel (0) target = $region5
    $region4: #{tpu_custom_call.1} parent=1 // pred_region
      %s13 = ssub.s32 256, 256
      %14 = vsyncadd [#allocation4], %s13
      %s15 = sshll.u32 [#allocation3], 4
      %s16 = int_to_ptr.vmem [resolvable:$true] %s15
      %21 = dma.hbm_to_vmem [thread:$0]  %s0, 256, %s16, [#allocation4], 128, 128, 8
    $region5: #{tpu_custom_call.1} parent=1 // pred_fallthru
      _
    // Predicated region
    $region6: #{tpu_custom_call.1} parent=1 // pred_check
      _
    $region7: #{tpu_custom_call.1} parent=1 // pred_check_branch
      %23 = sbr.rel (0) target = $region9
    $region8: #{tpu_custom_call.1} parent=1 // pred_region
      %s25 = ssub.s32 512, 512
      %26 = vsyncadd [#allocation7], %s25
      %s27 = sshll.u32 [#allocation6], 4
      %s28 = int_to_ptr.vmem [resolvable:$true] %s27
      %33 = dma.hbm_to_vmem [thread:$0]  %s1, 512, %s28, [#allocation7], 128, 128, 8
    $region9: #{tpu_custom_call.1} parent=1 // pred_fallthru
      _
    // Predicated region
    $region10: #{tpu_custom_call.1} parent=1 // pred_check
      _
    $region11: #{tpu_custom_call.1} parent=1 // pred_check_branch
      %35 = sbr.rel (0) target = $region13
    $region12: #{tpu_custom_call.1} parent=1 // pred_region
      %36 = dma.done [#allocation4], 256
    $region13: #{tpu_custom_call.1} parent=1 // pred_fallthru
      _
    // Predicated region
    $region14: #{tpu_custom_call.1} parent=1 // pred_check
      _
    $region15: #{tpu_custom_call.1} parent=1 // pred_check_branch
      %38 = sbr.rel (0) target = $region17
    $region16: #{tpu_custom_call.1} parent=1 // pred_region
      %39 = dma.done [#allocation7], 512
    $region17: #{tpu_custom_call.1} parent=1 // pred_fallthru
      _
    %p40 = scmp.eq.s32.totalorder 0, 0
    // Predicated region
    $region18: #{tpu_custom_call.1} parent=1 // pred_check
      %p41 = pneg %p40
    $region19: #{tpu_custom_call.1} parent=1 // pred_check_branch
      %43 = sbr.rel (%p41) target = $region21
    $region20: #{tpu_custom_call.1} parent=1 // pred_region
      %44 = vst [vmem:[#allocation8] sm:$0xff] 0.0
      %45 = vst [vmem:[#allocation8 + $0x8] sm:$0xff] 0.0
      %46 = vst [vmem:[#allocation2] sm:$0x1] 0.0
    $region21: #{tpu_custom_call.1} parent=1 // pred_fallthru
      _
    %v47 = vld [vmem:[#allocation6] sm:$0xff]
    %v48 = vld [vmem:[#allocation6 + $0x8] sm:$0xff]
    %v49 = vld [vmem:[#allocation6 + $0x10] sm:$0xff]
    %v50 = vld [vmem:[#allocation6 + $0x18] sm:$0xff]
    %v51 = vld [vmem:[#allocation8] sm:$0xff]
    %v52 = vld [vmem:[#allocation8 + $0x8] sm:$0xff]
    %v53 = vld [vmem:[#allocation3] sm:$0xff]
    %v54 = vld [vmem:[#allocation3 + $0x8] sm:$0xff]
    %vm55 = vcmask 261120
    %v57 = vsel %vm55, %v53, 0
    %v60 = vsel %vm55, %v54, 0
    %62 = vmatprep.subr.mxu0 0.0
    %63 = vmatpush1.msra.mxu0 0.0
    %64 = vmatprep.subr.mxu0 0.0
    %65 = vmatpush1.msra.mxu0 0.0
    %66 = vmatprep.subr.mxu0 0.0
    %67 = vmatpush1.msra.mxu0 0.0
    %68 = vmatprep.subr.mxu0 0.0
    %69 = vmatpush1.msra.mxu0 0.0
    %70 = vmatprep.subr.mxu0 0.0
    %71 = vmatpush1.msra.mxu0 0.0
    %72 = vmatprep.subr.mxu0 0.0
    %73 = vmatpush1.msra.mxu0 0.0
    %74 = vmatprep.subr.mxu0 0.0
    %75 = vmatpush1.msra.mxu0 0.0
    %76 = vmatprep.subr.mxu0 0.0
    %77 = vmatpush1.msra.mxu0 0.0
    %78 = vmatprep.subr.mxu0 0.0
    %79 = vmatpush1.msra.mxu0 0.0
    %80 = vmatprep.subr.mxu0 0.0
    %81 = vmatpush1.msra.mxu0 0.0
    %82 = vmatprep.subr.mxu0 0.0
    %83 = vmatpush1.msra.mxu0 0.0
    %84 = vmatprep.subr.mxu0 0.0
    %85 = vmatpush1.msra.mxu0 0.0
    %86 = vmatprep.subr.mxu0 0.0
    %87 = vmatpush1.msra.mxu0 %v50
    %88 = vmatprep.subr.mxu0 0.0
    %89 = vmatpush1.msra.mxu0 %v49
    %90 = vmatprep.subr.mxu0 0.0
    %91 = vmatpush1.msra.mxu0 %v48
    %92 = vmatprep.subr.mxu0 0.0
    %93 = vmatpush1.msra.mxu0 %v47
    %94 = vmatprep.subr.mxu0 0.0
    %95 = vmatpush2.msra.mxu0 0.0
    %96 = vmatprep.subr.mxu0 0.0
    %97 = vmatpush2.msra.mxu0 0.0
    %98 = vmatprep.subr.mxu0 0.0
    %99 = vmatpush2.msra.mxu0 0.0
    %100 = vmatprep.subr.mxu0 0.0
    %101 = vmatpush2.msra.mxu0 0.0
    %102 = vmatprep.subr.mxu0 0.0
    %103 = vmatpush2.msra.mxu0 0.0
    %104 = vmatprep.subr.mxu0 0.0
    %105 = vmatpush2.msra.mxu0 0.0
    %106 = vmatprep.subr.mxu0 0.0
    %107 = vmatpush2.msra.mxu0 0.0
    %108 = vmatprep.subr.mxu0 0.0
    %109 = vmatpush2.msra.mxu0 0.0
    %110 = vmatprep.subr.mxu0 0.0
    %111 = vmatpush2.msra.mxu0 0.0
    %112 = vmatprep.subr.mxu0 0.0
    %113 = vmatpush2.msra.mxu0 0.0
    %114 = vmatprep.subr.mxu0 0.0
    %115 = vmatpush2.msra.mxu0 0.0
    %116 = vmatprep.subr.mxu0 0.0
    %117 = vmatpush2.msra.mxu0 0.0
    %118 = vmatprep.subr.mxu0 0.0
    %119 = vmatpush2.msra.mxu0 0.0
    %120 = vmatprep.subr.mxu0 0.0
    %121 = vmatpush2.msra.mxu0 0.0
    %122 = vmatprep.subr.mxu0 0.0
    %123 = vmatpush2.msra.mxu0 0.0
    %124 = vmatprep.subr.mxu0 0.0
    %125 = vmatpush2.msra.mxu0 0.0
    %126 = vmatprep.mubr.f32.mxu0 0.0
    %127 = vmatmul.mubr.f32.gmra.mxu0 %v57
    %v128 = vpop.f32.mrf.mxu0
    %v129 = vadd.f32 0.0, %v128
    %v130 = vpop.f32.mrf.mxu0
    %131 = vmatprep.mubr.f32.mxu0 0.0
    %132 = vmatmul.mubr.f32.gmra.mxu0 %v60
    %v133 = vpop.f32.mrf.mxu0
    %v134 = vadd.f32 0.0, %v133
    %v135 = vpop.f32.mrf.mxu0
    %136 = vdwg.mxu0
    %v137 = vadd.f32 %v51, %v129
    %v138 = vadd.f32 %v52, %v134
    %139 = vst [vmem:[#allocation8] sm:$0xff] %v137
    %140 = vst [vmem:[#allocation8 + $0x8] sm:$0xff] %v138
    %v141 = vld [vmem:[#allocation2] sm:$0x1]
    %v142 = vmul.f32 %v47, %v47
    %v143 = vmul.f32 %v48, %v48
    %v144 = vmul.f32 %v49, %v49
    %v145 = vmul.f32 %v50, %v50
    %v146 = vadd.f32 %v142, %v143
    %v147 = vadd.f32 %v146, %v144
    %v148 = vadd.f32 %v147, %v145
    %v149 = vrot.slane %v148, 4
    %v150 = vadd.f32 %v148, %v149
    %v151 = vrot.slane %v150, 2
    %v152 = vadd.f32 %v150, %v151
    %v153 = vrot.slane %v152, 1
    %v154 = vadd.f32 %v152, %v153
    %v155 = vadd.f32 %v141, %v154
    %156 = vst [vmem:[#allocation2] sm:$0x1] %v155
    // Predicated region
    $region22: #{tpu_custom_call.1} parent=1 // pred_check
      %p157 = pneg %p40
    $region23: #{tpu_custom_call.1} parent=1 // pred_check_branch
      %159 = sbr.rel (%p157) target = $region25
    $region24: #{tpu_custom_call.1} parent=1 // pred_region
      %v160 = vld [vmem:[#allocation2] sm:$0x1]
      %v161 = vrsqrt.pop %v160
      %v162 = vmul.f32 %v160, %v161
      %vm163 = vcmp.eq.f32.partialorder %v160, inf
      %v164 = vsel %vm163, %v160, %v162
      %vm165 = vcmp.eq.f32.partialorder %v160, 0.0
      %v166 = vand.u32 %v160, 2147483648
      %v167 = vsel %vm165, %v166, %v164
      %v168 = vmax.f32 %v167, 1e-12
      %v169 = vrcp.pop %v168
      %v170 = vmul.f32 1.0, %v169
      %v171 = vld [vmem:[#allocation8] sm:$0xff]
      %v172 = vld [vmem:[#allocation8 + $0x8] sm:$0xff]
      %v174 = vlaneseq
      %v175 = vshrl.u32 %v174, 7
      %v176 = vsub.s32 0, %v175
      %v177 = vrot.slane %v170, %v176
      %v179 = vmul.f32 %v171, %v177
      %v180 = vmul.f32 %v172, %v177
      %181 = vst [vmem:[#allocation8] sm:$0xff] %v179
      %182 = vst [vmem:[#allocation8 + $0x8] sm:$0xff] %v180
    $region25: #{tpu_custom_call.1} parent=1 // pred_fallthru
      _
    // Predicated region
    $region26: #{tpu_custom_call.1} parent=1 // pred_check
      _
    $region27: #{tpu_custom_call.1} parent=1 // pred_check_branch
      %184 = sbr.rel (0) target = $region29
    $region28: #{tpu_custom_call.1} parent=1 // pred_region
      %s186 = ssub.s32 256, 256
      %187 = vsyncadd [#allocation5], %s186
      %s188 = sshll.u32 [#allocation8], 4
      %s189 = int_to_ptr.vmem [resolvable:$true] %s188
      %194 = dma.vmem_to_hbm [thread:$0]  %s189, 256, %s2, [#allocation5], 128, 128, 8
    $region29: #{tpu_custom_call.1} parent=1 // pred_fallthru
      _
    // Predicated region
    $region30: #{tpu_custom_call.1} parent=1 // pred_check
      _
    $region31: #{tpu_custom_call.1} parent=1 // pred_check_branch
      %196 = sbr.rel (0) target = $region33
    $region32: #{tpu_custom_call.1} parent=1 // pred_region
      %197 = dma.done [#allocation5], 256
    $region33: #{tpu_custom_call.1} parent=1 // pred_fallthru
      _
    %198 = vsyncpa [#allocation4], 1
    %199 = vsyncpa [#allocation7], 1
    %200 = vsyncpa [#allocation5], 1

</llo_original>
